<compile_context>
chip_gen: v7x
topology: tpu7x:2x2x1
jax: 0.10.0
libtpu: 0.0.40
codegen_flags: <defaults>
</compile_context>

<pallas_src>
import functools

import jax
import jax.numpy as jnp
from jax.experimental import pallas as pl
from jax.experimental.pallas import tpu as pltpu


def _round_up(x, m):
    return ((x + m - 1) // m) * m


def _vmem_capacity_bytes():
    """Physical VMEM per TensorCore; conservative fallback if unqueryable."""
    try:
        cap = int(pltpu.get_tpu_info().vmem_capacity_bytes)
        if cap > 0:
            return cap
    except Exception:
        pass
    return 64 * 1024 * 1024  # v7x per-TC size: safe lower bound on all gens.


def _num_tensorcores():
    """Best-effort TensorCore count per chip; default 1 (v5e/v6e)."""
    try:
        info = pltpu.get_tpu_info()
        for attr in ("num_cores", "num_tensorcores", "tensorcores_per_chip",
                     "cores_per_chip"):
            v = getattr(info, attr, None)
            if isinstance(v, int) and 1 <= v <= 8:
                return v
    except Exception:
        pass
    return 1


def _rmsnorm_kernel(x_ref, w_ref, o_ref, *, eps):
    # x_ref: (tile_rows, H) tile of hidden_states, w_ref: (1, H) weight row.
    x_in = x_ref[...]
    x = x_in.astype(jnp.float32)                       # hidden_states.to(float32)
    var = jnp.mean(x * x, axis=-1, keepdims=True)      # pow(2).mean(-1, keepdim=True)
    y = x * jax.lax.rsqrt(var + eps)                   # x * rsqrt(var + eps)
    y = y.astype(x_in.dtype)                           # .to(input_dtype)
    o_ref[...] = (w_ref[...] * y).astype(o_ref.dtype)  # weight * y (torch promotion)


def llama_rmsnorm(hidden_states, weight, eps=1e-6,
                  target_dma_bytes=8 * 1024 * 1024,
                  input_buffers=2,
                  cast_weight_to_input_dtype=False):
    """Pallas implementation of LlamaRMSNorm.forward.

    cast_weight_to_input_dtype=True keeps the output in the activation dtype
    (bf16 serving path: halves output write bytes) instead of strict torch
    type promotion.  Off by default to match the reference module exactly.
    """
    orig_shape = hidden_states.shape
    hidden = orig_shape[-1]
    x2d = hidden_states.reshape(-1, hidden)
    rows = x2d.shape[0]

    if cast_weight_to_input_dtype:
        weight = weight.astype(hidden_states.dtype)
    # Output dtype mirrors torch type promotion: weight * x(input_dtype).
    out_dtype = jnp.promote_types(weight.dtype, hidden_states.dtype)
    w2d = weight.reshape(1, hidden)

    in_bytes = jnp.dtype(hidden_states.dtype).itemsize
    out_bytes = jnp.dtype(out_dtype).itemsize
    w_bytes = jnp.dtype(weight.dtype).itemsize

    # Sublane packing: 8 rows for f32, 16 for bf16, 32 for int8/fp8.
    sublane = max(8, 32 // in_bytes)

    # Generation-aware VMEM budget (~70% of physical per-TC VMEM).
    vmem_cap = _vmem_capacity_bytes()
    vmem_budget = int(vmem_cap * 0.70)

    # Per-row working set: multi-buffered input + double-buffered output +
    # ~one live f32 temp per row (square+reduce is fused, not two temps).
    per_row_bytes = hidden * (input_buffers * in_bytes + 2 * out_bytes + 4)
    budget_rows = max(sublane, (vmem_budget // per_row_bytes) // sublane * sublane)

    # DMA-size-driven target: aim for >= target_dma_bytes per input tile so
    # per-step overhead (~0.35 us) and short DMAs don't cap HBM bandwidth.
    dma_rows = _round_up(max(1, target_dma_bytes // max(1, hidden * in_bytes)),
                         sublane)

    tile_rows = min(dma_rows, budget_rows, _round_up(rows, sublane))
    tile_rows = max(sublane, (tile_rows // sublane) * sublane)

    grid_rows = pl.cdiv(rows, tile_rows)

    # Split the single-step case across TensorCores only on >= 2-TC parts
    # (on 1-TC chips a forced split is pure per-step overhead).
    num_tc = _num_tensorcores()
    if num_tc >= 2 and grid_rows < num_tc and rows >= num_tc * sublane:
        tile_rows = max(sublane, _round_up(pl.cdiv(rows, num_tc), sublane))
        grid_rows = pl.cdiv(rows, tile_rows)

    # Explicit scoped-VMEM limit: buffered in/out tiles + weight + one f32
    # temp + headroom, capped below physical VMEM.
    vmem_limit = (
        input_buffers * tile_rows * hidden * in_bytes   # input buffers
        + 2 * tile_rows * hidden * out_bytes            # output double buffer
        + 2 * hidden * w_bytes                          # weight double buffer
        + tile_rows * hidden * 4                        # live f32 temp
        + (2 << 20)                                     # headroom
    )
    vmem_limit = min(max(vmem_limit, 16 << 20), int(vmem_cap * 0.9))

    # True (unpadded) traffic — no pad/slice round trips anymore.
    cost = pl.CostEstimate(
        flops=4 * rows * hidden,
        transcendentals=rows,
        bytes_accessed=rows * hidden * (in_bytes + out_bytes) + hidden * w_bytes,
    )

    if input_buffers != 2:
        in_x_spec = pl.BlockSpec((tile_rows, hidden), lambda i: (i, 0),
                                 pipeline_mode=pl.Buffered(input_buffers))
    else:
        in_x_spec = pl.BlockSpec((tile_rows, hidden), lambda i: (i, 0))

    out = pl.pallas_call(
        functools.partial(_rmsnorm_kernel, eps=eps),
        out_shape=jax.ShapeDtypeStruct((rows, hidden), out_dtype),
        grid_spec=pltpu.PrefetchScalarGridSpec(
            num_scalar_prefetch=0,
            grid=(grid_rows,),
            in_specs=[
                in_x_spec,
                pl.BlockSpec((1, hidden), lambda i: (0, 0)),
            ],
            out_specs=pl.BlockSpec((tile_rows, hidden), lambda i: (i, 0)),
        ),
        compiler_params=pltpu.CompilerParams(
            dimension_semantics=("parallel",),
            vmem_limit_bytes=int(vmem_limit),
        ),
        cost_estimate=cost,
    )(x2d, w2d)

    return out.reshape(orig_shape[:-1] + (hidden,))


if __name__ == "__main__":
    eps = 1e-6
    key = jax.random.PRNGKey(0)
    k1, k2 = jax.random.split(key)

    # Test 1: f32 activations, row count a multiple of the sublane.
    batch, seq, hidden = 2, 8, 128
    x = jax.random.normal(k1, (batch, seq, hidden), dtype=jnp.float32)
    # Deterministic parameter init per LlamaRMSNorm.__init__: weight = ones(hidden).
    weight = jnp.ones((hidden,), dtype=jnp.float32)
    out = jax.block_until_ready(llama_rmsnorm(x, weight, eps=eps))

    x32 = x.astype(jnp.float32)
    ref = weight * (x32 * jax.lax.rsqrt(
        jnp.mean(x32 * x32, axis=-1, keepdims=True) + eps)).astype(x.dtype)
    assert out.shape == ref.shape and out.dtype == ref.dtype
    assert jnp.allclose(out, ref, atol=1e-5, rtol=1e-5)

    # Test 2: bf16 activations, f32 weight, row count (15) NOT a multiple of
    # the tile — exercises the partial boundary block (no pad/slice path).
    b2, s2, h2 = 3, 5, 256
    xb = jax.random.normal(k2, (b2, s2, h2), dtype=jnp.float32).astype(jnp.bfloat16)
    w2 = 1.0 + 0.01 * jnp.arange(h2, dtype=jnp.float32)
    out2 = jax.block_until_ready(llama_rmsnorm(xb, w2, eps=eps))

    xb32 = xb.astype(jnp.float32)
    ref2 = w2 * (xb32 * jax.lax.rsqrt(
        jnp.mean(xb32 * xb32, axis=-1, keepdims=True) + eps)).astype(xb.dtype)
    assert out2.shape == ref2.shape and out2.dtype == ref2.dtype
    assert jnp.allclose(out2.astype(jnp.float32), ref2.astype(jnp.float32),
                        atol=2e-2, rtol=2e-2)

    # Test 3: serving-style option — weight cast to activation dtype (bf16 out).
    out3 = jax.block_until_ready(
        llama_rmsnorm(xb, w2, eps=eps, cast_weight_to_input_dtype=True))
    ref3 = (w2.astype(jnp.bfloat16) *
            (xb32 * jax.lax.rsqrt(
                jnp.mean(xb32 * xb32, axis=-1, keepdims=True) + eps)
             ).astype(jnp.bfloat16))
    assert out3.shape == ref3.shape and out3.dtype == jnp.bfloat16
    assert jnp.allclose(out3.astype(jnp.float32), ref3.astype(jnp.float32),
                        atol=2e-2, rtol=2e-2)

    print("KERNEL_OK")
</pallas_src>

<mosaic_0001>
module attributes {stable_mosaic.version = 11 : i64} {
  func.func @_rmsnorm_kernel(%arg0: i32, %arg1: memref<16x128xf32, #tpu.memory_space<vmem>>, %arg2: memref<1x128xf32, #tpu.memory_space<vmem>>, %arg3: memref<16x128xf32, #tpu.memory_space<vmem>>) attributes {dimension_semantics = [#tpu.dimension_semantics<parallel>], iteration_bounds = array<i64: 1>, scalar_prefetch = 0 : i64, scratch_operands = 0 : i64, tpu.core_type = #tpu.core_type<tc>, window_params = [{transform_indices = @transform_0, window_bounds = array<i64: 16, 128>}, {pipeline_mode = #tpu.pipeline_mode<synchronous>, transform_indices = @transform_1, window_bounds = array<i64: 1, 128>}, {transform_indices = @transform_2, window_bounds = array<i64: 16, 128>}]} {
    %c0 = arith.constant 0 : index
    %c0_0 = arith.constant 0 : index
    %0 = vector.load %arg1[%c0, %c0_0] : memref<16x128xf32, #tpu.memory_space<vmem>>, vector<16x128xf32>
    %1 = arith.mulf %0, %0 : vector<16x128xf32>
    %cst = arith.constant dense<0.000000e+00> : vector<16xf32>
    %2 = vector.multi_reduction <add>, %1, %cst [1] : vector<16x128xf32> to vector<16xf32>
    %3 = vector.shape_cast %2 : vector<16xf32> to vector<16x1xf32>
    %cst_1 = arith.constant 1.280000e+02 : f32
    %4 = vector.broadcast %cst_1 : f32 to vector<16x1xf32>
    %5 = arith.divf %3, %4 : vector<16x1xf32>
    %cst_2 = arith.constant 9.99999997E-7 : f32
    %6 = vector.broadcast %cst_2 : f32 to vector<16x1xf32>
    %7 = arith.addf %5, %6 : vector<16x1xf32>
    %8 = math.rsqrt %7 : vector<16x1xf32>
    %9 = vector.broadcast %8 : vector<16x1xf32> to vector<16x128xf32>
    %10 = arith.mulf %0, %9 : vector<16x128xf32>
    %c0_3 = arith.constant 0 : index
    %c0_4 = arith.constant 0 : index
    %11 = vector.load %arg2[%c0_3, %c0_4] : memref<1x128xf32, #tpu.memory_space<vmem>>, vector<1x128xf32>
    %12 = vector.broadcast %11 : vector<1x128xf32> to vector<16x128xf32>
    %13 = arith.mulf %12, %10 : vector<16x128xf32>
    %c0_5 = arith.constant 0 : index
    %c0_6 = arith.constant 0 : index
    %14 = vector.load %arg3[%c0_5, %c0_6] : memref<16x128xf32, #tpu.memory_space<vmem>>, vector<16x128xf32>
    tpu.vector_store %arg3[%c0_5, %c0_6], %13 {strides = array<i32>} : memref<16x128xf32, #tpu.memory_space<vmem>>, vector<16x128xf32>,
    return
  }
  func.func @transform_0(%arg0: i32) -> (i32, i32) {
    %c0_i32 = arith.constant 0 : i32
    %c0_i32_0 = arith.constant 0 : i32
    return %arg0, %c0_i32 : i32, i32
  }
  func.func @transform_1(%arg0: i32) -> (i32, i32) {
    %c0_i32 = arith.constant 0 : i32
    %c0_i32_0 = arith.constant 0 : i32
    %c0_i32_1 = arith.constant 0 : i32
    return %c0_i32, %c0_i32_0 : i32, i32
  }
  func.func @transform_2(%arg0: i32) -> (i32, i32) {
    %c0_i32 = arith.constant 0 : i32
    %c0_i32_0 = arith.constant 0 : i32
    return %arg0, %c0_i32 : i32, i32
  }
}

</mosaic_0001>

<llo_original>
// kernel: tpu_custom_call.1
$region0: #{tpu_custom_call.1}
  #allocation0 [shape = 'u32[]', space=smem, size = 0x4, offset = 0x4, fixed_abs, tag = 'smem constant byte address 0x4 - core index']
  #allocation1 [shape = 'u32[144,128]{1,0:T(1,128)}', space=vmem, size = 0x12000, scoped, tag = 'internal scratch']
  %s0 = inlined_call_operand.hbm [shape: f32[16,128], index: 0, kind: input, shape index: {}]
  %s1 = inlined_call_operand.vmem [shape: f32[1,128], index: 1, kind: input, shape index: {}]
  %s2 = inlined_call_operand.hbm [shape: f32[16,128], index: 2, kind: output, shape index: {}]
  %s3 = sld [smem:[#allocation0]]
  $region22: #{tpu_custom_call.1} parent=0
    _
  %s5 = ssub.s32 1, %s3
  %s6 = scalar_select 0, %s5, %s3
  $region1: #{tpu_custom_call.1} parent=0
    #allocation2 [shape = 'u8[8192]{0}', space=vmem, size = 0x2000, scoped, tag = 'input window, operand 0, single buffered']
    #allocation3 [shape = 's32[1]{0}', space=sflag, size = 0x4, scoped, tag = 'scoped memory for tpu_custom_call.1']
    #allocation4 [shape = 's32[1]{0}', space=sflag, size = 0x4, scoped, tag = 'scoped memory for tpu_custom_call.1']
    #allocation5 [shape = 'u8[8192]{0}', space=vmem, size = 0x2000, scoped, tag = 'output window, operand 0, single buffered']
    %7 = vsyncpa [#allocation3], 0
    %8 = vsyncpa [#allocation4], 0
    // Predicated region
    $region2: #{tpu_custom_call.1} parent=1 // pred_check
      _
    $region3: #{tpu_custom_call.1} parent=1 // pred_check_branch
      %10 = sbr.rel (0) target = $region5
    $region4: #{tpu_custom_call.1} parent=1 // pred_region
      %s12 = ssub.s32 256, 256
      %13 = vsyncadd [#allocation3], %s12
      %s14 = sshll.u32 [#allocation2], 4
      %s15 = int_to_ptr.vmem [resolvable:$true] %s14
      %20 = dma.hbm_to_vmem [thread:$0]  %s0, 256, %s15, [#allocation3], 128, 128, 8
    $region5: #{tpu_custom_call.1} parent=1 // pred_fallthru
      _
    // Predicated region
    $region6: #{tpu_custom_call.1} parent=1 // pred_check
      _
    $region7: #{tpu_custom_call.1} parent=1 // pred_check_branch
      %22 = sbr.rel (0) target = $region9
    $region8: #{tpu_custom_call.1} parent=1 // pred_region
      _
    $region9: #{tpu_custom_call.1} parent=1 // pred_fallthru
      _
    // Predicated region
    $region10: #{tpu_custom_call.1} parent=1 // pred_check
      _
    $region11: #{tpu_custom_call.1} parent=1 // pred_check_branch
      %24 = sbr.rel (0) target = $region13
    $region12: #{tpu_custom_call.1} parent=1 // pred_region
      %25 = dma.done [#allocation3], 256
    $region13: #{tpu_custom_call.1} parent=1 // pred_fallthru
      _
    %v26 = vld [vmem:[#allocation2] sm:$0xff]
    %v27 = vld [vmem:[#allocation2 + $0x8] sm:$0xff]
    %v28 = vmul.f32 %v26, %v26
    %v29 = vmul.f32 %v27, %v27
    %30 = vadd.xlane.f32.xlu0 %v28
    %v31 = vpop.xlane.xlu0 %30
    %32 = vadd.xlane.f32.xlu0 %v29
    %v33 = vpop.xlane.xlu0 %32
    %v34 = vrcp.pop 128.0
    %v35 = vmul.f32 %v31, %v34
    %v36 = vmul.f32 %v33, %v34
    %v37 = vadd.f32 %v35, 1e-06
    %v38 = vadd.f32 %v36, 1e-06
    %v39 = vrsqrt.pop %v37
    %v40 = vrsqrt.pop %v38
    %v41 = vmul.f32 %v26, %v39
    %v42 = vmul.f32 %v27, %v40
    %v43 = vld [vmem:[%s1] sm:$0x1]
    %v45 = vlaneseq
    %v46 = vshrl.u32 %v45, 7
    %v47 = vsub.s32 0, %v46
    %v48 = vrot.slane %v43, %v47
    %v50 = vmul.f32 %v48, %v41
    %v51 = vmul.f32 %v48, %v42
    %52 = vst [vmem:[#allocation5] sm:$0xff] %v50
    %53 = vst [vmem:[#allocation5 + $0x8] sm:$0xff] %v51
    // Predicated region
    $region14: #{tpu_custom_call.1} parent=1 // pred_check
      _
    $region15: #{tpu_custom_call.1} parent=1 // pred_check_branch
      %55 = sbr.rel (0) target = $region17
    $region16: #{tpu_custom_call.1} parent=1 // pred_region
      %s57 = ssub.s32 256, 256
      %58 = vsyncadd [#allocation4], %s57
      %s59 = sshll.u32 [#allocation5], 4
      %s60 = int_to_ptr.vmem [resolvable:$true] %s59
      %65 = dma.vmem_to_hbm [thread:$0]  %s60, 256, %s2, [#allocation4], 128, 128, 8
    $region17: #{tpu_custom_call.1} parent=1 // pred_fallthru
      _
    // Predicated region
    $region18: #{tpu_custom_call.1} parent=1 // pred_check
      _
    $region19: #{tpu_custom_call.1} parent=1 // pred_check_branch
      %67 = sbr.rel (0) target = $region21
    $region20: #{tpu_custom_call.1} parent=1 // pred_region
      %68 = dma.done [#allocation4], 256
    $region21: #{tpu_custom_call.1} parent=1 // pred_fallthru
      _
    %69 = vsyncpa [#allocation3], 1
    %70 = vsyncpa [#allocation4], 1

</llo_original>
